<compile_context>
chip_gen: v6e
topology: v6e:2x2x1
jax: 0.10.0
libtpu: 0.0.40
codegen_flags: <defaults>
</compile_context>

<pallas_src>
import math

import jax
import jax.numpy as jnp
from jax import lax
from jax.experimental import pallas as pl
from jax.experimental.pallas import tpu as pltpu


def _cdiv(a, b):
    return -(-a // b)


def _round_up(a, m):
    return _cdiv(a, m) * m


def _teacher_kernel(x_ref, w2_ref, out_ref, acc_ref):
    # x_ref:  (TN, TD) tile of the input (native dtype)
    # w2_ref: (2,  TD) rows 0/1 of the pre-scaled Linear weight
    # out_ref:(1,  TN) lane-dense output row for this N tile (f32)
    # acc_ref:(2,  TN) f32 accumulator across the D (contraction) grid axis
    k = pl.program_id(1)

    @pl.when(k == 0)
    def _():
        acc_ref[...] = jnp.zeros_like(acc_ref)

    # (2, TD) . (TN, TD)^T -> (2, TN): contract D on the MXU, accumulate f32.
    acc_ref[...] += lax.dot_general(
        w2_ref[...], x_ref[...],
        dimension_numbers=(((1,), (1,)), ((), ())),
        preferred_element_type=jnp.float32,
    )

    @pl.when(k == pl.num_programs(1) - 1)
    def _():
        h0 = acc_ref[0:1, :]                       # (1, TN)
        h1 = acc_ref[1:2, :]                       # (1, TN)
        out_ref[...] = jnp.tanh(h0 + h1 * h1 * h1 - 3.0 * h1).astype(out_ref.dtype)


# Double-buffered x budget.  Total VMEM footprint stays ~<= 40 MiB, which fits
# v7x's 64 MiB physical VMEM per TensorCore and leaves headroom on v5e/v6e.
_X_BUDGET_BYTES = 36 << 20


def neural_network_teacher_forward(x, weight, target="TEST",
                                   x_budget_bytes=_X_BUDGET_BYTES):
    """x: (N, D); weight: (K, D) in torch nn.Linear layout.  Returns (N,) f32."""
    if target != "TEST":
        raise ValueError("target not implemented yet.")
    n, d = x.shape
    k_feat, d2 = weight.shape
    assert d == d2 and k_feat >= 2

    # Only the first two output features feed the 'TEST' target.  Fold the
    # 1/sqrt(D) scale into this tiny slab (free) and match x's streaming dtype
    # so the MXU sees uniform operands (pure-f32 path stays exact).
    w2 = (weight[:2, :].astype(jnp.float32) * (1.0 / math.sqrt(d))).astype(x.dtype)

    itemsize = x.dtype.itemsize

    # ---- contraction (D) tiling -------------------------------------------
    # Common case: whole D per step.  Extreme-D corner: 128-aligned D chunks,
    # zero-padded (exact: zero columns contribute nothing to the dot).
    max_td = max(128, x_budget_bytes // (2 * 128 * itemsize))
    if d <= max_td:
        td, k_tiles = d, 1
    else:
        td = (max_td // 128) * 128
        d_pad = _round_up(d, td)
        k_tiles = d_pad // td
        if d_pad != d:
            x = jnp.pad(x, ((0, 0), (0, d_pad - d)))
            w2 = jnp.pad(w2, ((0, 0), (0, d_pad - d)))

    # ---- row (N) tiling -----------------------------------------------------
    # Largest 128-multiple whose double-buffered x tile fits the budget; for
    # non-tiny N keep >= 2 grid steps so the "parallel" row axis can shard
    # across v7x's two TensorCores (no effect on single-core v5e/v6e).
    per_row = 2 * td * itemsize
    tn_budget = max(128, (x_budget_bytes // per_row) // 128 * 128)
    if n <= tn_budget:
        tn = _round_up(_cdiv(n, 2), 128) if n >= 1024 else n
    else:
        tn = tn_budget
    n_tiles = _cdiv(n, tn)

    # Raise the scoped-VMEM limit to cover the actual footprint (defaults are
    # only 16/32 MiB); stay well under v7x's 64 MiB physical VMEM.
    vmem_needed = (2 * tn * td * itemsize      # x double buffer
                   + 2 * 2 * td * itemsize     # w2 double buffer
                   + 2 * tn * 4                # out double buffer (f32)
                   + 2 * tn * 4)               # f32 accumulator scratch
    vmem_limit = int(min(max(vmem_needed + (2 << 20), 32 << 20), 56 << 20))

    out = pl.pallas_call(
        _teacher_kernel,
        out_shape=jax.ShapeDtypeStruct((1, n), jnp.float32),
        grid=(n_tiles, k_tiles),
        in_specs=[
            pl.BlockSpec((tn, td), lambda i, j: (i, j)),   # x tile
            pl.BlockSpec((2, td), lambda i, j: (0, j)),    # weight slab
        ],
        out_specs=pl.BlockSpec((1, tn), lambda i, j: (0, i)),
        scratch_shapes=[pltpu.VMEM((2, tn), jnp.float32)],
        compiler_params=pltpu.CompilerParams(
            dimension_semantics=("parallel", "arbitrary"),
            vmem_limit_bytes=vmem_limit,
        ),
    )(x, w2)
    return out[0]  # (N,)


def _reference(x, weight):
    h = x @ weight.T / jnp.sqrt(jnp.float32(x.shape[1]))
    return jnp.tanh(h[:, 0] + h[:, 1] ** 3 - 3.0 * h[:, 1])


if __name__ == "__main__":
    key = jax.random.PRNGKey(0)

    # 1) Small shapes consistent with Linear(D, K): single-tile path.
    N, D, K = 8, 16, 4
    kx, kw = jax.random.split(key)
    x = jax.random.normal(kx, (N, D), dtype=jnp.float32)
    start_weight_teacher = jax.random.normal(kw, (K, D), dtype=jnp.float32)
    out = neural_network_teacher_forward(x, start_weight_teacher, target="TEST")
    out = jax.block_until_ready(out)
    ref = _reference(x, start_weight_teacher)
    assert out.shape == (N,)
    assert jnp.allclose(out, ref, atol=1e-5, rtol=1e-5)

    # 2) Forced-small budget: exercises multi-tile N, the D-reduction grid
    #    axis, and the zero-padded D corner (D=200 -> padded to 256).
    N2, D2, K2 = 1280, 200, 6
    kx2, kw2 = jax.random.split(jax.random.PRNGKey(0), 2)
    x2 = jax.random.normal(kx2, (N2, D2), dtype=jnp.float32)
    w_full2 = jax.random.normal(kw2, (K2, D2), dtype=jnp.float32)
    out2 = neural_network_teacher_forward(x2, w_full2, target="TEST",
                                          x_budget_bytes=128 << 10)
    out2 = jax.block_until_ready(out2)
    ref2 = _reference(x2, w_full2)
    assert out2.shape == (N2,)
    assert jnp.allclose(out2, ref2, atol=1e-5, rtol=1e-5)

    # 3) Default budget with N >= 1024: exercises the >=2-step "parallel" path.
    N3, D3, K3 = 2048, 128, 4
    kx3, kw3 = jax.random.split(jax.random.PRNGKey(0), 2)
    x3 = jax.random.normal(kx3, (N3, D3), dtype=jnp.float32)
    w_full3 = jax.random.normal(kw3, (K3, D3), dtype=jnp.float32)
    out3 = neural_network_teacher_forward(x3, w_full3, target="TEST")
    out3 = jax.block_until_ready(out3)
    ref3 = _reference(x3, w_full3)
    assert out3.shape == (N3,)
    assert jnp.allclose(out3, ref3, atol=1e-5, rtol=1e-5)

    print("KERNEL_OK")
</pallas_src>

<mosaic_0001>
module attributes {stable_mosaic.version = 11 : i64} {
  func.func @_teacher_kernel(%arg0: i32, %arg1: i32, %arg2: memref<8x16xf32, #tpu.memory_space<vmem>>, %arg3: memref<2x16xf32, #tpu.memory_space<vmem>>, %arg4: memref<1x8xf32, #tpu.memory_space<vmem>>, %arg5: memref<2x8xf32, #tpu.memory_space<vmem>>) attributes {dimension_semantics = [#tpu.dimension_semantics<parallel>, #tpu.dimension_semantics<arbitrary>], iteration_bounds = array<i64: 1, 1>, scalar_prefetch = 0 : i64, scratch_operands = 1 : i64, tpu.core_type = #tpu.core_type<tc>, window_params = [{transform_indices = @transform_0, window_bounds = array<i64: 8, 16>}, {transform_indices = @transform_1, window_bounds = array<i64: 2, 16>}, {transform_indices = @transform_2, window_bounds = array<i64: 1, 8>}]} {
    %c0_i32 = arith.constant 0 : i32
    %0 = arith.cmpi eq, %arg1, %c0_i32 : i32
    %1 = arith.extui %0 : i1 to i32
    %c0_i32_0 = arith.constant 0 : i32
    %2 = arith.cmpi ne, %1, %c0_i32_0 : i32
    scf.if %2 {
      %cst_10 = arith.constant 0.000000e+00 : f32
      %12 = vector.broadcast %cst_10 : f32 to vector<2x8xf32>
      %c0_11 = arith.constant 0 : index
      %c0_12 = arith.constant 0 : index
      %13 = vector.load %arg5[%c0_11, %c0_12] : memref<2x8xf32, #tpu.memory_space<vmem>>, vector<2x8xf32>
      tpu.vector_store %arg5[%c0_11, %c0_12], %12 {strides = array<i32>} : memref<2x8xf32, #tpu.memory_space<vmem>>, vector<2x8xf32>,
    } else {
    }
    %c0 = arith.constant 0 : index
    %c0_1 = arith.constant 0 : index
    %3 = vector.load %arg5[%c0, %c0_1] : memref<2x8xf32, #tpu.memory_space<vmem>>, vector<2x8xf32>
    %c0_2 = arith.constant 0 : index
    %c0_3 = arith.constant 0 : index
    %4 = vector.load %arg3[%c0_2, %c0_3] : memref<2x16xf32, #tpu.memory_space<vmem>>, vector<2x16xf32>
    %c0_4 = arith.constant 0 : index
    %c0_5 = arith.constant 0 : index
    %5 = vector.load %arg2[%c0_4, %c0_5] : memref<8x16xf32, #tpu.memory_space<vmem>>, vector<8x16xf32>
    %cst = arith.constant dense<0.000000e+00> : vector<2x8xf32>
    %6 = tpu.matmul %4, %5, %cst {dimension_numbers = #tpu.dot_dimension_numbers<[1], [1], [0], [0], [0, 0, 1, 0], [], []>} : vector<2x16xf32>, vector<8x16xf32>, vector<2x8xf32> -> vector<2x8xf32>
    %7 = arith.addf %3, %6 : vector<2x8xf32>
    %c0_6 = arith.constant 0 : index
    %c0_7 = arith.constant 0 : index
    %8 = vector.load %arg5[%c0_6, %c0_7] : memref<2x8xf32, #tpu.memory_space<vmem>>, vector<2x8xf32>
    tpu.vector_store %arg5[%c0_6, %c0_7], %7 {strides = array<i32>} : memref<2x8xf32, #tpu.memory_space<vmem>>, vector<2x8xf32>,
    %c0_i32_8 = arith.constant 0 : i32
    %9 = arith.cmpi eq, %arg1, %c0_i32_8 : i32
    %10 = arith.extui %9 : i1 to i32
    %c0_i32_9 = arith.constant 0 : i32
    %11 = arith.cmpi ne, %10, %c0_i32_9 : i32
    scf.if %11 {
      %c0_10 = arith.constant 0 : index
      %c0_11 = arith.constant 0 : index
      %12 = vector.load %arg5[%c0_10, %c0_11] : memref<2x8xf32, #tpu.memory_space<vmem>>, vector<1x8xf32>
      %c1 = arith.constant 1 : index
      %c0_12 = arith.constant 0 : index
      %13 = vector.load %arg5[%c1, %c0_12] : memref<2x8xf32, #tpu.memory_space<vmem>>, vector<1x8xf32>
      %14 = arith.mulf %13, %13 : vector<1x8xf32>
      %15 = arith.mulf %14, %13 : vector<1x8xf32>
      %16 = arith.addf %12, %15 : vector<1x8xf32>
      %cst_13 = arith.constant 3.000000e+00 : f32
      %17 = vector.broadcast %cst_13 : f32 to vector<1x8xf32>
      %18 = arith.mulf %17, %13 : vector<1x8xf32>
      %19 = arith.subf %16, %18 : vector<1x8xf32>
      %20 = math.tanh %19 : vector<1x8xf32>
      %c0_14 = arith.constant 0 : index
      %c0_15 = arith.constant 0 : index
      %21 = vector.load %arg4[%c0_14, %c0_15] : memref<1x8xf32, #tpu.memory_space<vmem>>, vector<1x8xf32>
      tpu.vector_store %arg4[%c0_14, %c0_15], %20 {strides = array<i32>} : memref<1x8xf32, #tpu.memory_space<vmem>>, vector<1x8xf32>,
    } else {
    }
    return
  }
  func.func @transform_0(%arg0: i32, %arg1: i32) -> (i32, i32) {
    %c0_i32 = arith.constant 0 : i32
    return %arg0, %arg1 : i32, i32
  }
  func.func @transform_1(%arg0: i32, %arg1: i32) -> (i32, i32) {
    %c0_i32 = arith.constant 0 : i32
    %c0_i32_0 = arith.constant 0 : i32
    return %c0_i32, %arg1 : i32, i32
  }
  func.func @transform_2(%arg0: i32, %arg1: i32) -> (i32, i32) {
    %c0_i32 = arith.constant 0 : i32
    %c0_i32_0 = arith.constant 0 : i32
    return %c0_i32, %arg0 : i32, i32
  }
}

</mosaic_0001>

<llo_original>
// kernel: tpu_custom_call.1
$region0: #{tpu_custom_call.1}
  #allocation0 [shape = 'u32[]', space=smem, size = 0x4, offset = 0x4, fixed_abs, tag = 'smem constant byte address 0x4 - core index']
  #allocation1 [shape = 'u32[144,128]{1,0:T(1,128)}', space=vmem, size = 0x12000, scoped, tag = 'internal scratch']
  #allocation2 [shape = 'f32[2,8]{1,0:T(2,128)}', space=vmem, size = 0x400, scoped, tag = 'scratch operand']
  %s0 = inlined_call_operand.hbm [shape: f32[8,16], index: 0, kind: input, shape index: {}]
  %s1 = inlined_call_operand.hbm [shape: f32[2,16], index: 1, kind: input, shape index: {}]
  %s2 = inlined_call_operand.hbm [shape: f32[1,8], index: 2, kind: output, shape index: {}]
  %s3 = sld [smem:[#allocation0]]
  $region34: #{tpu_custom_call.1} parent=0
    _
  %s5 = ssub.s32 1, %s3
  %s6 = scalar_select 0, %s5, %s3
  $region1: #{tpu_custom_call.1} parent=0
    #allocation3 [shape = 'u8[4096]{0}', space=vmem, size = 0x1000, scoped, tag = 'input window, operand 0, single buffered']
    #allocation4 [shape = 's32[1]{0}', space=sflag, size = 0x4, scoped, tag = 'scoped memory for tpu_custom_call.1']
    #allocation5 [shape = 's32[1]{0}', space=sflag, size = 0x4, scoped, tag = 'scoped memory for tpu_custom_call.1']
    #allocation6 [shape = 'u8[1024]{0}', space=vmem, size = 0x400, scoped, tag = 'input window, operand 1, single buffered']
    #allocation7 [shape = 's32[1]{0}', space=sflag, size = 0x4, scoped, tag = 'scoped memory for tpu_custom_call.1']
    #allocation8 [shape = 'u8[512]{0}', space=vmem, size = 0x400, scoped, tag = 'output window, operand 0, single buffered']
    %7 = vsyncpa [#allocation4], 0
    %8 = vsyncpa [#allocation7], 0
    %9 = vsyncpa [#allocation5], 0
    // Predicated region
    $region2: #{tpu_custom_call.1} parent=1 // pred_check
      _
    $region3: #{tpu_custom_call.1} parent=1 // pred_check_branch
      %11 = sbr.rel (0) target = $region5
    $region4: #{tpu_custom_call.1} parent=1 // pred_region
      %s13 = ssub.s32 128, 128
      %14 = vsyncadd [#allocation4], %s13
      %s16 = sshll.u32 [#allocation3], 4
      %s17 = int_to_ptr.vmem [resolvable:$true] %s16
      %19 = dma.hbm_to_vmem [thread:$0]  %s0, 128, %s17, [#allocation4]
    $region5: #{tpu_custom_call.1} parent=1 // pred_fallthru
      _
    // Predicated region
    $region6: #{tpu_custom_call.1} parent=1 // pred_check
      _
    $region7: #{tpu_custom_call.1} parent=1 // pred_check_branch
      %21 = sbr.rel (0) target = $region9
    $region8: #{tpu_custom_call.1} parent=1 // pred_region
      %s23 = ssub.s32 32, 32
      %24 = vsyncadd [#allocation7], %s23
      %s26 = sshll.u32 [#allocation6], 4
      %s27 = int_to_ptr.vmem [resolvable:$true] %s26
      %29 = dma.hbm_to_vmem [thread:$0]  %s1, 32, %s27, [#allocation7]
    $region9: #{tpu_custom_call.1} parent=1 // pred_fallthru
      _
    // Predicated region
    $region10: #{tpu_custom_call.1} parent=1 // pred_check
      _
    $region11: #{tpu_custom_call.1} parent=1 // pred_check_branch
      %31 = sbr.rel (0) target = $region13
    $region12: #{tpu_custom_call.1} parent=1 // pred_region
      %32 = dma.done [#allocation4], 128
    $region13: #{tpu_custom_call.1} parent=1 // pred_fallthru
      _
    // Predicated region
    $region14: #{tpu_custom_call.1} parent=1 // pred_check
      _
    $region15: #{tpu_custom_call.1} parent=1 // pred_check_branch
      %34 = sbr.rel (0) target = $region17
    $region16: #{tpu_custom_call.1} parent=1 // pred_region
      %35 = dma.done [#allocation7], 32
    $region17: #{tpu_custom_call.1} parent=1 // pred_fallthru
      _
    %p36 = scmp.eq.s32.totalorder 0, 0
    // Predicated region
    $region18: #{tpu_custom_call.1} parent=1 // pred_check
      %p37 = pneg %p36
    $region19: #{tpu_custom_call.1} parent=1 // pred_check_branch
      %39 = sbr.rel (%p37) target = $region21
    $region20: #{tpu_custom_call.1} parent=1 // pred_region
      %vm40 = vcmask 58368
      %41 = vst.msk [vmem:[#allocation2] sm:$0x3] %vm40, 0.0
    $region21: #{tpu_custom_call.1} parent=1 // pred_fallthru
      _
    %v42 = vld [vmem:[#allocation2] sm:$0x3]
    %v43 = vld [vmem:[#allocation6] sm:$0x3]
    %v44 = vld [vmem:[#allocation3] sm:$0xff]
    %vm45 = vcmask 130048
    %v47 = vsel %vm45, %v43, 0
    %v50 = vsel %vm45, %v44, 0
    %52 = vmatprep.subr.mxu0 0.0
    %53 = vmatpush1.xpose.msra.mxu0 0.0
    %54 = vmatprep.subr.mxu0 0.0
    %55 = vmatpush1.xpose.msra.mxu0 0.0
    %56 = vmatprep.subr.mxu0 0.0
    %57 = vmatpush1.xpose.msra.mxu0 0.0
    %58 = vmatprep.subr.mxu0 0.0
    %59 = vmatpush1.xpose.msra.mxu0 0.0
    %60 = vmatprep.subr.mxu0 0.0
    %61 = vmatpush1.xpose.msra.mxu0 0.0
    %62 = vmatprep.subr.mxu0 0.0
    %63 = vmatpush1.xpose.msra.mxu0 0.0
    %64 = vmatprep.subr.mxu0 0.0
    %65 = vmatpush1.xpose.msra.mxu0 0.0
    %66 = vmatprep.subr.mxu0 0.0
    %67 = vmatpush1.xpose.msra.mxu0 0.0
    %68 = vmatprep.subr.mxu0 0.0
    %69 = vmatpush1.xpose.msra.mxu0 0.0
    %70 = vmatprep.subr.mxu0 0.0
    %71 = vmatpush1.xpose.msra.mxu0 0.0
    %72 = vmatprep.subr.mxu0 0.0
    %73 = vmatpush1.xpose.msra.mxu0 0.0
    %74 = vmatprep.subr.mxu0 0.0
    %75 = vmatpush1.xpose.msra.mxu0 0.0
    %76 = vmatprep.subr.mxu0 0.0
    %77 = vmatpush1.xpose.msra.mxu0 0.0
    %78 = vmatprep.subr.mxu0 0.0
    %79 = vmatpush1.xpose.msra.mxu0 0.0
    %80 = vmatprep.subr.mxu0 0.0
    %81 = vmatpush1.xpose.msra.mxu0 0.0
    %82 = vmatprep.subr.mxu0 0.0
    %83 = vmatpush1.xpose.msra.mxu0 %v50
    %84 = vmatprep.subr.mxu0 0.0
    %85 = vmatpush2.xpose.msra.mxu0 0.0
    %86 = vmatprep.subr.mxu0 0.0
    %87 = vmatpush2.xpose.msra.mxu0 0.0
    %88 = vmatprep.subr.mxu0 0.0
    %89 = vmatpush2.xpose.msra.mxu0 0.0
    %90 = vmatprep.subr.mxu0 0.0
    %91 = vmatpush2.xpose.msra.mxu0 0.0
    %92 = vmatprep.subr.mxu0 0.0
    %93 = vmatpush2.xpose.msra.mxu0 0.0
    %94 = vmatprep.subr.mxu0 0.0
    %95 = vmatpush2.xpose.msra.mxu0 0.0
    %96 = vmatprep.subr.mxu0 0.0
    %97 = vmatpush2.xpose.msra.mxu0 0.0
    %98 = vmatprep.subr.mxu0 0.0
    %99 = vmatpush2.xpose.msra.mxu0 0.0
    %100 = vmatprep.subr.mxu0 0.0
    %101 = vmatpush2.xpose.msra.mxu0 0.0
    %102 = vmatprep.subr.mxu0 0.0
    %103 = vmatpush2.xpose.msra.mxu0 0.0
    %104 = vmatprep.subr.mxu0 0.0
    %105 = vmatpush2.xpose.msra.mxu0 0.0
    %106 = vmatprep.subr.mxu0 0.0
    %107 = vmatpush2.xpose.msra.mxu0 0.0
    %108 = vmatprep.subr.mxu0 0.0
    %109 = vmatpush2.xpose.msra.mxu0 0.0
    %110 = vmatprep.subr.mxu0 0.0
    %111 = vmatpush2.xpose.msra.mxu0 0.0
    %112 = vmatprep.subr.mxu0 0.0
    %113 = vmatpush2.xpose.msra.mxu0 0.0
    %114 = vmatprep.subr.mxu0 0.0
    %115 = vmatpush2.xpose.msra.mxu0 0.0
    %116 = vmatprep.mubr.f32.mxu0 0.0
    %117 = vmatmul.mubr.f32.gmra.mxu0 %v47
    %v118 = vpop.f32.mrf.mxu0
    %v119 = vadd.f32 0.0, %v118
    %v120 = vpop.f32.mrf.mxu0
    %121 = vdwg.mxu0
    %v122 = vadd.f32 %v42, %v119
    %vm123 = vcmask 58368
    %124 = vst.msk [vmem:[#allocation2] sm:$0x3] %vm123, %v122
    // Predicated region
    $region22: #{tpu_custom_call.1} parent=1 // pred_check
      %p125 = pneg %p36
    $region23: #{tpu_custom_call.1} parent=1 // pred_check_branch
      %127 = sbr.rel (%p125) target = $region25
    $region24: #{tpu_custom_call.1} parent=1 // pred_region
      %v128 = vld [vmem:[#allocation2] sm:$0x1]
      %v129 = vld [vmem:[#allocation2 + $0x1] sm:$0x1]
      %v130 = vmul.f32 %v129, %v129
      %v131 = vmul.f32 %v130, %v129
      %v132 = vadd.f32 %v128, %v131
      %v133 = vmul.f32 %v129, 3.0
      %v134 = vsub.f32 %v132, %v133
      %v135 = vtanh.pop %v134
      %vm136 = vcmask 57344
      %137 = vst.msk [vmem:[#allocation8] sm:$0x1] %vm136, %v135
    $region25: #{tpu_custom_call.1} parent=1 // pred_fallthru
      _
    // Predicated region
    $region26: #{tpu_custom_call.1} parent=1 // pred_check
      _
    $region27: #{tpu_custom_call.1} parent=1 // pred_check_branch
      %139 = sbr.rel (0) target = $region29
    $region28: #{tpu_custom_call.1} parent=1 // pred_region
      %s141 = ssub.s32 16, 16
      %142 = vsyncadd [#allocation5], %s141
      %s144 = sshll.u32 [#allocation8], 4
      %s145 = int_to_ptr.vmem [resolvable:$true] %s144
      %147 = dma.vmem_to_hbm [thread:$0]  %s145, 16, %s2, [#allocation5]
    $region29: #{tpu_custom_call.1} parent=1 // pred_fallthru
      _
    // Predicated region
    $region30: #{tpu_custom_call.1} parent=1 // pred_check
      _
    $region31: #{tpu_custom_call.1} parent=1 // pred_check_branch
      %149 = sbr.rel (0) target = $region33
    $region32: #{tpu_custom_call.1} parent=1 // pred_region
      %150 = dma.done [#allocation5], 16
    $region33: #{tpu_custom_call.1} parent=1 // pred_fallthru
      _
    %151 = vsyncpa [#allocation4], 1
    %152 = vsyncpa [#allocation7], 1
    %153 = vsyncpa [#allocation5], 1

</llo_original>
